<compile_context>
chip_gen: v7x
topology: tpu7x:2x2x1
jax: 0.10.0
libtpu: 0.0.40
codegen_flags: <defaults>
</compile_context>

<pallas_src>
import numpy as np
import jax
import jax.numpy as jnp
from jax.experimental import pallas as pl
from jax.experimental.pallas import tpu as pltpu


def _round_up(x, m):
    return (x + m - 1) // m * m


# Lane-dense padded widths of the fused hidden layers.
H1_PAD = 128   # layer-1 output lanes (96 real + 32 zero-pad)
H2_PAD = 256   # layer-2 output lanes (192 real + 64 zero-pad)
H3 = 128       # layer-3 output lanes (64 + 64, already lane-dense)


# ----------------------------------------------------------------------------
# Parameter init (mimics nn.Linear's U(-1/sqrt(fan_in), 1/sqrt(fan_in)))
# ----------------------------------------------------------------------------
def make_mpc_params(robot_state_dim, object_state_dim, seed=0, dtype=jnp.float32):
    A_sizes = [robot_state_dim, 64, 128, 64]
    B_sizes = [object_state_dim, 32, 64, 64]
    key = jax.random.PRNGKey(seed)

    def linear(k, fan_in, fan_out):
        kw, kb = jax.random.split(k)
        bound = 1.0 / jnp.sqrt(jnp.float32(fan_in))
        w = jax.random.uniform(kw, (fan_in, fan_out), dtype, -bound, bound)
        b = jax.random.uniform(kb, (1, fan_out), dtype, -bound, bound)
        return w, b

    keys = jax.random.split(key, 7)
    params = {}
    params["A"] = [linear(keys[i], A_sizes[i], A_sizes[i + 1]) for i in range(3)]
    params["B"] = [linear(keys[3 + i], B_sizes[i], B_sizes[i + 1]) for i in range(3)]
    params["M"] = linear(keys[6], A_sizes[-1] + B_sizes[-1],
                         robot_state_dim + object_state_dim)
    return params


# ----------------------------------------------------------------------------
# Host-side packing: all weights/biases -> one lane-dense (rows, 256) slab.
# Block-diagonal fusion of the A/B branches is baked in here.
# ----------------------------------------------------------------------------
def pack_mpc_params(params, rs_dim, os_dim, dtype=jnp.bfloat16):
    (aw0, ab0), (aw1, ab1), (aw2, ab2) = params["A"]
    (bw0, bb0), (bw1, bb1), (bw2, bb2) = params["B"]
    mw, mb = params["M"]

    # Layer widths derived from the param shapes (no hard-coded split).
    h1a, h1b = aw0.shape[1], bw0.shape[1]            # 64, 32
    h2a, h2b = aw1.shape[1], bw1.shape[1]            # 128, 64
    h3a, h3b = aw2.shape[1], bw2.shape[1]            # 64, 64
    h1, h2, h3 = h1a + h1b, h2a + h2b, h3a + h3b     # 96, 192, 128
    in_dim = rs_dim + os_dim
    out_dim = mw.shape[1]
    assert mw.shape[0] == h3, "merge in_features must equal concat branch width"
    assert h1 <= H1_PAD and h2 <= H2_PAD and h3 == H3 and out_dim <= 128

    ncols = H2_PAD                                    # 256-lane slab

    # 16-aligned row offsets (sublane-tile aligned even for bf16 packing).
    o_w1 = 0
    o_w2 = o_w1 + _round_up(in_dim, 16)
    o_w3 = o_w2 + H1_PAD
    o_w4 = o_w3 + H2_PAD
    o_b = o_w4 + H3
    total = o_b + 16

    buf = np.zeros((total, ncols), np.float32)
    # layer 1: [rs | os] rows -> blockdiag(aw0, bw0); cols h1..128 stay zero
    buf[o_w1:o_w1 + rs_dim, 0:h1a] = np.asarray(aw0)
    buf[o_w1 + rs_dim:o_w1 + in_dim, h1a:h1] = np.asarray(bw0)
    # layer 2: blockdiag(aw1, bw1); rows h1..128 and cols h2..256 stay zero
    buf[o_w2:o_w2 + h1a, 0:h2a] = np.asarray(aw1)
    buf[o_w2 + h1a:o_w2 + h1, h2a:h2] = np.asarray(bw1)
    # layer 3: blockdiag(aw2, bw2); rows h2..256 stay zero
    buf[o_w3:o_w3 + h2a, 0:h3a] = np.asarray(aw2)
    buf[o_w3 + h2a:o_w3 + h2, h3a:h3] = np.asarray(bw2)
    # merge layer: narrow (out_dim) columns, no padding needed
    buf[o_w4:o_w4 + h3, 0:out_dim] = np.asarray(mw)
    # biases, one row each
    buf[o_b + 0, 0:h1a] = np.asarray(ab0).reshape(-1)
    buf[o_b + 0, h1a:h1] = np.asarray(bb0).reshape(-1)
    buf[o_b + 1, 0:h2a] = np.asarray(ab1).reshape(-1)
    buf[o_b + 1, h2a:h2] = np.asarray(bb1).reshape(-1)
    buf[o_b + 2, 0:h3a] = np.asarray(ab2).reshape(-1)
    buf[o_b + 2, h3a:h3] = np.asarray(bb2).reshape(-1)
    buf[o_b + 3, 0:out_dim] = np.asarray(mb).reshape(-1)

    layout = dict(o_w1=o_w1, o_w2=o_w2, o_w3=o_w3, o_w4=o_w4, o_b=o_b,
                  in_dim=in_dim, out_dim=out_dim)
    return jnp.asarray(buf, dtype=dtype), layout


# ----------------------------------------------------------------------------
# Kernel (closure so all offsets/widths are compile-time constants)
# ----------------------------------------------------------------------------
def _build_kernel(layout, nonlinearity="tanh"):
    o_w1, o_w2, o_w3 = layout["o_w1"], layout["o_w2"], layout["o_w3"]
    o_w4, o_b = layout["o_w4"], layout["o_b"]
    in_dim, out_dim = layout["in_dim"], layout["out_dim"]
    act = jax.nn.relu if nonlinearity == "relu" else jnp.tanh
    f32 = jnp.float32

    def kernel(x_ref, p_ref, out_ref):
        cdt = p_ref.dtype                         # compute dtype (bf16 or f32)
        x = x_ref[...].astype(cdt)                # (tb, in_dim) = [rs | os]

        # Static, lane-dense slices into the resident packed parameter slab.
        w1 = p_ref[o_w1:o_w1 + in_dim, 0:H1_PAD]  # (in_dim, 128)
        w2 = p_ref[o_w2:o_w2 + H1_PAD, :]         # (128, 256)  block-diag
        w3 = p_ref[o_w3:o_w3 + H2_PAD, 0:H3]      # (256, 128)  block-diag
        w4 = p_ref[o_w4:o_w4 + H3, 0:out_dim]     # (128, out_dim) merge
        b1 = p_ref[o_b + 0:o_b + 1, 0:H1_PAD].astype(f32)
        b2 = p_ref[o_b + 1:o_b + 2, :].astype(f32)
        b3 = p_ref[o_b + 2:o_b + 3, 0:H3].astype(f32)
        b4 = p_ref[o_b + 3:o_b + 4, 0:out_dim].astype(f32)

        # Fused layer 1: [rs|os] @ blockdiag(aw0,bw0) + [ab0|bb0|0], activation.
        # Padding lanes see act(0) = 0 and stay zero through the network.
        x1 = act(jnp.dot(x, w1, preferred_element_type=f32) + b1)
        # Fused layer 2 (activated); fused layer 3 has NO activation — it is
        # the last layer of each branch in the reference network.
        x2 = act(jnp.dot(x1.astype(cdt), w2, preferred_element_type=f32) + b2)
        x3 = jnp.dot(x2.astype(cdt), w3, preferred_element_type=f32) + b3
        # Merge layer: x3 == [robot_out | object_out]; single linear, no act.
        out = jnp.dot(x3.astype(cdt), w4, preferred_element_type=f32) + b4
        out_ref[...] = out.astype(out_ref.dtype)

    return kernel


# ----------------------------------------------------------------------------
# Wrapper
# ----------------------------------------------------------------------------
def _pick_batch_tile(batch):
    # Per-grid-step overhead is ~0.35 us, so favour big tiles (VMEM per step is
    # only a few MiB even at 2048 rows).  Keep >=2 grid steps when the batch
    # allows it so the "parallel" axis shards across both TCs on v7x.
    if batch <= 16:
        return batch
    return min(2048, _round_up(pl.cdiv(batch, 2), 8))


def mpc_network_forward(robot_state, object_state, params, nonlinearity="tanh",
                        block_batch=None, compute_dtype=jnp.bfloat16):
    batch, rs_dim = robot_state.shape
    batch_o, os_dim = object_state.shape
    assert batch == batch_o
    in_dim = rs_dim + os_dim

    packed, layout = pack_mpc_params(params, rs_dim, os_dim, dtype=compute_dtype)
    out_dim = layout["out_dim"]

    # Single fused input stream -> layer 1 is one dot / one input DMA stream.
    x = jnp.concatenate([robot_state, object_state], axis=1)

    tb = block_batch if block_batch is not None else _pick_batch_tile(batch)
    if tb >= batch:
        tb = batch                       # single step; full-dim block is legal
    else:
        tb = max(8, _round_up(tb, 8))    # partial-dim blocks need multiples of 8
    grid = (pl.cdiv(batch, tb),)

    kernel = _build_kernel(layout, nonlinearity)

    return pl.pallas_call(
        kernel,
        out_shape=jax.ShapeDtypeStruct((batch, out_dim), robot_state.dtype),
        grid=grid,
        in_specs=[
            pl.BlockSpec((tb, in_dim), lambda i: (i, 0)),   # fused state stream
            pl.BlockSpec(packed.shape, lambda i: (0, 0)),   # packed params, resident
        ],
        out_specs=pl.BlockSpec((tb, out_dim), lambda i: (i, 0)),
        compiler_params=pltpu.CompilerParams(
            dimension_semantics=("parallel",),   # megacore sharding on v7x
            vmem_limit_bytes=32 * 1024 * 1024,   # headroom over v5e's 16 MiB default
        ),
    )(x, packed)


# ----------------------------------------------------------------------------
# Plain-JAX reference mirroring the PyTorch forward (true-f32 matmuls)
# ----------------------------------------------------------------------------
def _reference_forward(robot_state, object_state, params, nonlinearity="tanh"):
    act = jax.nn.relu if nonlinearity == "relu" else jnp.tanh
    (aw0, ab0), (aw1, ab1), (aw2, ab2) = params["A"]
    (bw0, bb0), (bw1, bb1), (bw2, bb2) = params["B"]
    mw, mb = params["M"]
    with jax.default_matmul_precision("highest"):
        a = act(robot_state @ aw0 + ab0)
        a = act(a @ aw1 + ab1)
        a = a @ aw2 + ab2
        b = act(object_state @ bw0 + bb0)
        b = act(b @ bw1 + bb1)
        b = b @ bw2 + bb2
        return jnp.concatenate([a, b], axis=1) @ mw + mb


if __name__ == "__main__":
    robot_state_dim = 8
    object_state_dim = 6
    batch = 4

    key = jax.random.PRNGKey(0)
    krs, kos = jax.random.split(key)
    robot_state = jax.random.normal(krs, (batch, robot_state_dim), jnp.float32)
    object_state = jax.random.normal(kos, (batch, object_state_dim), jnp.float32)

    params = make_mpc_params(robot_state_dim, object_state_dim, seed=100)
    ref = _reference_forward(robot_state, object_state, params)

    # Exact-math validation path (f32 weights/activations in the kernel).
    out_f32 = mpc_network_forward(robot_state, object_state, params,
                                  compute_dtype=jnp.float32)
    out_f32 = jax.block_until_ready(out_f32)
    assert out_f32.shape == (batch, robot_state_dim + object_state_dim)
    assert jnp.allclose(out_f32, ref, atol=1e-3, rtol=1e-3), "f32 kernel mismatch"

    # Default fast path: bf16 operands on the MXU, f32 accumulation.
    out_bf16 = mpc_network_forward(robot_state, object_state, params)
    out_bf16 = jax.block_until_ready(out_bf16)
    assert out_bf16.shape == ref.shape
    assert bool(jnp.all(jnp.isfinite(out_bf16)))
    assert float(jnp.max(jnp.abs(out_bf16 - ref))) < 0.25, "bf16 path too far off"

    print("KERNEL_OK")
</pallas_src>

<mosaic_0001>
module attributes {stable_mosaic.version = 11 : i64} {
  func.func @kernel(%arg0: i32, %arg1: memref<4x14xf32, #tpu.memory_space<vmem>>, %arg2: memref<544x256xf32, #tpu.memory_space<vmem>>, %arg3: memref<4x14xf32, #tpu.memory_space<vmem>>) attributes {dimension_semantics = [#tpu.dimension_semantics<parallel>], iteration_bounds = array<i64: 1>, scalar_prefetch = 0 : i64, scratch_operands = 0 : i64, tpu.core_type = #tpu.core_type<tc>, window_params = [{transform_indices = @transform_0, window_bounds = array<i64: 4, 14>}, {pipeline_mode = #tpu.pipeline_mode<synchronous>, transform_indices = @transform_1, window_bounds = array<i64: 544, 256>}, {transform_indices = @transform_2, window_bounds = array<i64: 4, 14>}]} {
    %c0 = arith.constant 0 : index
    %c0_0 = arith.constant 0 : index
    %0 = vector.load %arg1[%c0, %c0_0] : memref<4x14xf32, #tpu.memory_space<vmem>>, vector<4x14xf32>
    %c0_1 = arith.constant 0 : index
    %c0_2 = arith.constant 0 : index
    %1 = vector.load %arg2[%c0_1, %c0_2] : memref<544x256xf32, #tpu.memory_space<vmem>>, vector<14x128xf32>
    %c16 = arith.constant 16 : index
    %c0_3 = arith.constant 0 : index
    %2 = vector.load %arg2[%c16, %c0_3] : memref<544x256xf32, #tpu.memory_space<vmem>>, vector<128x256xf32>
    %c144 = arith.constant 144 : index
    %c0_4 = arith.constant 0 : index
    %3 = vector.load %arg2[%c144, %c0_4] : memref<544x256xf32, #tpu.memory_space<vmem>>, vector<256x128xf32>
    %c400 = arith.constant 400 : index
    %c0_5 = arith.constant 0 : index
    %4 = vector.load %arg2[%c400, %c0_5] : memref<544x256xf32, #tpu.memory_space<vmem>>, vector<128x14xf32>
    %c528 = arith.constant 528 : index
    %c0_6 = arith.constant 0 : index
    %5 = vector.load %arg2[%c528, %c0_6] : memref<544x256xf32, #tpu.memory_space<vmem>>, vector<1x128xf32>
    %c529 = arith.constant 529 : index
    %c0_7 = arith.constant 0 : index
    %6 = vector.load %arg2[%c529, %c0_7] : memref<544x256xf32, #tpu.memory_space<vmem>>, vector<1x256xf32>
    %c530 = arith.constant 530 : index
    %c0_8 = arith.constant 0 : index
    %7 = vector.load %arg2[%c530, %c0_8] : memref<544x256xf32, #tpu.memory_space<vmem>>, vector<1x128xf32>
    %c531 = arith.constant 531 : index
    %c0_9 = arith.constant 0 : index
    %8 = vector.load %arg2[%c531, %c0_9] : memref<544x256xf32, #tpu.memory_space<vmem>>, vector<1x14xf32>
    %cst = arith.constant dense<0.000000e+00> : vector<4x128xf32>
    %9 = tpu.matmul %0, %1, %cst {dimension_numbers = #tpu.dot_dimension_numbers<[1], [0], [0], [1], [0, 0, 1, 1], [], []>} : vector<4x14xf32>, vector<14x128xf32>, vector<4x128xf32> -> vector<4x128xf32>
    %10 = vector.broadcast %5 : vector<1x128xf32> to vector<4x128xf32>
    %11 = arith.addf %9, %10 : vector<4x128xf32>
    %12 = math.tanh %11 : vector<4x128xf32>
    %cst_10 = arith.constant dense<0.000000e+00> : vector<4x256xf32>
    %13 = tpu.matmul %12, %2, %cst_10 {dimension_numbers = #tpu.dot_dimension_numbers<[1], [0], [0], [1], [0, 0, 1, 1], [], []>} : vector<4x128xf32>, vector<128x256xf32>, vector<4x256xf32> -> vector<4x256xf32>
    %14 = vector.broadcast %6 : vector<1x256xf32> to vector<4x256xf32>
    %15 = arith.addf %13, %14 : vector<4x256xf32>
    %16 = math.tanh %15 : vector<4x256xf32>
    %cst_11 = arith.constant dense<0.000000e+00> : vector<4x128xf32>
    %17 = tpu.matmul %16, %3, %cst_11 {dimension_numbers = #tpu.dot_dimension_numbers<[1], [0], [0], [1], [0, 0, 1, 1], [], []>} : vector<4x256xf32>, vector<256x128xf32>, vector<4x128xf32> -> vector<4x128xf32>
    %18 = vector.broadcast %7 : vector<1x128xf32> to vector<4x128xf32>
    %19 = arith.addf %17, %18 : vector<4x128xf32>
    %cst_12 = arith.constant dense<0.000000e+00> : vector<4x14xf32>
    %20 = tpu.matmul %19, %4, %cst_12 {dimension_numbers = #tpu.dot_dimension_numbers<[1], [0], [0], [1], [0, 0, 1, 1], [], []>} : vector<4x128xf32>, vector<128x14xf32>, vector<4x14xf32> -> vector<4x14xf32>
    %21 = vector.broadcast %8 : vector<1x14xf32> to vector<4x14xf32>
    %22 = arith.addf %20, %21 : vector<4x14xf32>
    %c0_13 = arith.constant 0 : index
    %c0_14 = arith.constant 0 : index
    %23 = vector.load %arg3[%c0_13, %c0_14] : memref<4x14xf32, #tpu.memory_space<vmem>>, vector<4x14xf32>
    tpu.vector_store %arg3[%c0_13, %c0_14], %22 {strides = array<i32>} : memref<4x14xf32, #tpu.memory_space<vmem>>, vector<4x14xf32>,
    return
  }
  func.func @transform_0(%arg0: i32) -> (i32, i32) {
    %c0_i32 = arith.constant 0 : i32
    %c0_i32_0 = arith.constant 0 : i32
    return %arg0, %c0_i32 : i32, i32
  }
  func.func @transform_1(%arg0: i32) -> (i32, i32) {
    %c0_i32 = arith.constant 0 : i32
    %c0_i32_0 = arith.constant 0 : i32
    %c0_i32_1 = arith.constant 0 : i32
    return %c0_i32, %c0_i32_0 : i32, i32
  }
  func.func @transform_2(%arg0: i32) -> (i32, i32) {
    %c0_i32 = arith.constant 0 : i32
    %c0_i32_0 = arith.constant 0 : i32
    return %arg0, %c0_i32 : i32, i32
  }
}

</mosaic_0001>

<llo_original>
// kernel: tpu_custom_call.1
$region0: #{tpu_custom_call.1}
  #allocation0 [shape = 'u32[]', space=smem, size = 0x4, offset = 0x4, fixed_abs, tag = 'smem constant byte address 0x4 - core index']
  #allocation1 [shape = 'u32[144,128]{1,0:T(1,128)}', space=vmem, size = 0x12000, scoped, tag = 'internal scratch']
  %s0 = inlined_call_operand.hbm [shape: f32[4,14], index: 0, kind: input, shape index: {}]
  %s1 = inlined_call_operand.hbm [shape: f32[544,256], index: 1, kind: input, shape index: {}]
  %s2 = inlined_call_operand.hbm [shape: f32[4,14], index: 2, kind: output, shape index: {}]
  %s3 = sld [smem:[#allocation0]]
  $region26: #{tpu_custom_call.1} parent=0
    _
  %s5 = ssub.s32 1, %s3
  %s6 = scalar_select 0, %s5, %s3
  $region1: #{tpu_custom_call.1} parent=0
    #allocation2 [shape = 'u8[2048]{0}', space=vmem, size = 0x800, scoped, tag = 'input window, operand 0, single buffered']
    #allocation3 [shape = 's32[1]{0}', space=sflag, size = 0x4, scoped, tag = 'scoped memory for tpu_custom_call.1']
    #allocation4 [shape = 's32[1]{0}', space=sflag, size = 0x4, scoped, tag = 'scoped memory for tpu_custom_call.1']
    #allocation5 [shape = 'u8[557056]{0}', space=vmem, size = 0x88000, scoped, tag = 'input window, operand 1, single buffered']
    #allocation6 [shape = 's32[1]{0}', space=sflag, size = 0x4, scoped, tag = 'scoped memory for tpu_custom_call.1']
    #allocation7 [shape = 'u8[2048]{0}', space=vmem, size = 0x800, scoped, tag = 'output window, operand 0, single buffered']
    %7 = vsyncpa [#allocation3], 0
    %8 = vsyncpa [#allocation6], 0
    %9 = vsyncpa [#allocation4], 0
    // Predicated region
    $region2: #{tpu_custom_call.1} parent=1 // pred_check
      _
    $region3: #{tpu_custom_call.1} parent=1 // pred_check_branch
      %11 = sbr.rel (0) target = $region5
    $region4: #{tpu_custom_call.1} parent=1 // pred_region
      %s13 = ssub.s32 64, 64
      %14 = vsyncadd [#allocation3], %s13
      %s16 = sshll.u32 [#allocation2], 4
      %s17 = int_to_ptr.vmem [resolvable:$true] %s16
      %19 = dma.hbm_to_vmem [thread:$0]  %s0, 64, %s17, [#allocation3]
    $region5: #{tpu_custom_call.1} parent=1 // pred_fallthru
      _
    // Predicated region
    $region6: #{tpu_custom_call.1} parent=1 // pred_check
      _
    $region7: #{tpu_custom_call.1} parent=1 // pred_check_branch
      %21 = sbr.rel (0) target = $region9
    $region8: #{tpu_custom_call.1} parent=1 // pred_region
      %s23 = ssub.s32 17408, 17408
      %24 = vsyncadd [#allocation6], %s23
      %s25 = sshll.u32 [#allocation5], 4
      %s26 = int_to_ptr.vmem [resolvable:$true] %s25
      %31 = dma.hbm_to_vmem [thread:$0]  %s1, 17408, %s26, [#allocation6], 256, 256, 16
    $region9: #{tpu_custom_call.1} parent=1 // pred_fallthru
      _
    // Predicated region
    $region10: #{tpu_custom_call.1} parent=1 // pred_check
      _
    $region11: #{tpu_custom_call.1} parent=1 // pred_check_branch
      %33 = sbr.rel (0) target = $region13
    $region12: #{tpu_custom_call.1} parent=1 // pred_region
      %34 = dma.done [#allocation3], 64
    $region13: #{tpu_custom_call.1} parent=1 // pred_fallthru
      _
    // Predicated region
    $region14: #{tpu_custom_call.1} parent=1 // pred_check
      _
    $region15: #{tpu_custom_call.1} parent=1 // pred_check_branch
      %36 = sbr.rel (0) target = $region17
    $region16: #{tpu_custom_call.1} parent=1 // pred_region
      %37 = dma.done [#allocation6], 17408
    $region17: #{tpu_custom_call.1} parent=1 // pred_fallthru
      _
    %v38 = vld [vmem:[#allocation2] sm:$0xf]
    %v39 = vld [vmem:[#allocation5] sm:$0xff]
    %v40 = vld [vmem:[#allocation5 + $0x10] sm:$0x3f]
    %v41 = vld [vmem:[#allocation5 + $0x20] sm:$0xff]
    %v42 = vld [vmem:[#allocation5 + $0x28] sm:$0xff]
    %v43 = vld [vmem:[#allocation5 + $0x30] sm:$0xff]
    %v44 = vld [vmem:[#allocation5 + $0x38] sm:$0xff]
    %v45 = vld [vmem:[#allocation5 + $0x40] sm:$0xff]
    %v46 = vld [vmem:[#allocation5 + $0x48] sm:$0xff]
    %v47 = vld [vmem:[#allocation5 + $0x50] sm:$0xff]
    %v48 = vld [vmem:[#allocation5 + $0x58] sm:$0xff]
    %v49 = vld [vmem:[#allocation5 + $0x60] sm:$0xff]
    %v50 = vld [vmem:[#allocation5 + $0x68] sm:$0xff]
    %v51 = vld [vmem:[#allocation5 + $0x70] sm:$0xff]
    %v52 = vld [vmem:[#allocation5 + $0x78] sm:$0xff]
    %v53 = vld [vmem:[#allocation5 + $0x80] sm:$0xff]
    %v54 = vld [vmem:[#allocation5 + $0x88] sm:$0xff]
    %v55 = vld [vmem:[#allocation5 + $0x90] sm:$0xff]
    %v56 = vld [vmem:[#allocation5 + $0x98] sm:$0xff]
    %v57 = vld [vmem:[#allocation5 + $0xa0] sm:$0xff]
    %v58 = vld [vmem:[#allocation5 + $0xa8] sm:$0xff]
    %v59 = vld [vmem:[#allocation5 + $0xb0] sm:$0xff]
    %v60 = vld [vmem:[#allocation5 + $0xb8] sm:$0xff]
    %v61 = vld [vmem:[#allocation5 + $0xc0] sm:$0xff]
    %v62 = vld [vmem:[#allocation5 + $0xc8] sm:$0xff]
    %v63 = vld [vmem:[#allocation5 + $0xd0] sm:$0xff]
    %v64 = vld [vmem:[#allocation5 + $0xd8] sm:$0xff]
    %v65 = vld [vmem:[#allocation5 + $0xe0] sm:$0xff]
    %v66 = vld [vmem:[#allocation5 + $0xe8] sm:$0xff]
    %v67 = vld [vmem:[#allocation5 + $0xf0] sm:$0xff]
    %v68 = vld [vmem:[#allocation5 + $0xf8] sm:$0xff]
    %v69 = vld [vmem:[#allocation5 + $0x100] sm:$0xff]
    %v70 = vld [vmem:[#allocation5 + $0x108] sm:$0xff]
    %v71 = vld [vmem:[#allocation5 + $0x110] sm:$0xff]
    %v72 = vld [vmem:[#allocation5 + $0x118] sm:$0xff]
    %v73 = vld [vmem:[#allocation5 + $0x120] sm:$0xff]
    %v74 = vld [vmem:[#allocation5 + $0x130] sm:$0xff]
    %v75 = vld [vmem:[#allocation5 + $0x140] sm:$0xff]
    %v76 = vld [vmem:[#allocation5 + $0x150] sm:$0xff]
    %v77 = vld [vmem:[#allocation5 + $0x160] sm:$0xff]
    %v78 = vld [vmem:[#allocation5 + $0x170] sm:$0xff]
    %v79 = vld [vmem:[#allocation5 + $0x180] sm:$0xff]
    %v80 = vld [vmem:[#allocation5 + $0x190] sm:$0xff]
    %v81 = vld [vmem:[#allocation5 + $0x1a0] sm:$0xff]
    %v82 = vld [vmem:[#allocation5 + $0x1b0] sm:$0xff]
    %v83 = vld [vmem:[#allocation5 + $0x1c0] sm:$0xff]
    %v84 = vld [vmem:[#allocation5 + $0x1d0] sm:$0xff]
    %v85 = vld [vmem:[#allocation5 + $0x1e0] sm:$0xff]
    %v86 = vld [vmem:[#allocation5 + $0x1f0] sm:$0xff]
    %v87 = vld [vmem:[#allocation5 + $0x200] sm:$0xff]
    %v88 = vld [vmem:[#allocation5 + $0x210] sm:$0xff]
    %v89 = vld [vmem:[#allocation5 + $0x220] sm:$0xff]
    %v90 = vld [vmem:[#allocation5 + $0x230] sm:$0xff]
    %v91 = vld [vmem:[#allocation5 + $0x240] sm:$0xff]
    %v92 = vld [vmem:[#allocation5 + $0x250] sm:$0xff]
    %v93 = vld [vmem:[#allocation5 + $0x260] sm:$0xff]
    %v94 = vld [vmem:[#allocation5 + $0x270] sm:$0xff]
    %v95 = vld [vmem:[#allocation5 + $0x280] sm:$0xff]
    %v96 = vld [vmem:[#allocation5 + $0x290] sm:$0xff]
    %v97 = vld [vmem:[#allocation5 + $0x2a0] sm:$0xff]
    %v98 = vld [vmem:[#allocation5 + $0x2b0] sm:$0xff]
    %v99 = vld [vmem:[#allocation5 + $0x2c0] sm:$0xff]
    %v100 = vld [vmem:[#allocation5 + $0x2d0] sm:$0xff]
    %v101 = vld [vmem:[#allocation5 + $0x2e0] sm:$0xff]
    %v102 = vld [vmem:[#allocation5 + $0x2f0] sm:$0xff]
    %v103 = vld [vmem:[#allocation5 + $0x300] sm:$0xff]
    %v104 = vld [vmem:[#allocation5 + $0x310] sm:$0xff]
    %v105 = vld [vmem:[#allocation5 + $0x320] sm:$0xff]
    %v106 = vld [vmem:[#allocation5 + $0x330] sm:$0xff]
    %v107 = vld [vmem:[#allocation5 + $0x340] sm:$0xff]
    %v108 = vld [vmem:[#allocation5 + $0x350] sm:$0xff]
    %v109 = vld [vmem:[#allocation5 + $0x360] sm:$0xff]
    %v110 = vld [vmem:[#allocation5 + $0x370] sm:$0xff]
    %v111 = vld [vmem:[#allocation5 + $0x380] sm:$0xff]
    %v112 = vld [vmem:[#allocation5 + $0x390] sm:$0xff]
    %v113 = vld [vmem:[#allocation5 + $0x3a0] sm:$0xff]
    %v114 = vld [vmem:[#allocation5 + $0x3b0] sm:$0xff]
    %v115 = vld [vmem:[#allocation5 + $0x3c0] sm:$0xff]
    %v116 = vld [vmem:[#allocation5 + $0x3d0] sm:$0xff]
    %v117 = vld [vmem:[#allocation5 + $0x3e0] sm:$0xff]
    %v118 = vld [vmem:[#allocation5 + $0x3f0] sm:$0xff]
    %v119 = vld [vmem:[#allocation5 + $0x400] sm:$0xff]
    %v120 = vld [vmem:[#allocation5 + $0x410] sm:$0xff]
    %v121 = vld [vmem:[#allocation5 + $0x420] ss:$0 sm:$0xff]
    %s122 = scalar_lea.vmem [#allocation5], 1057
    %v123 = vld [vmem:[%s122] ss:$8 sm:$0x3]
    %v124 = vld [vmem:[#allocation5 + $0x422] ss:$0 sm:$0xff]
    %v125 = vld [vmem:[#allocation5 + $0x423] ss:$0 sm:$0xff]
    %vm126 = vcmask 113664
    %v128 = vsel %vm126, %v38, 0
    %vm130 = vcmask 1045504
    %v132 = vsel %vm130, %v40, 0
    %134 = vmatprep.subr.mxu0 0.0
    %135 = vmatpush1.msra.mxu0 %v39
    %136 = vmatprep.subr.mxu0 0.0
    %137 = vmatpush1.msra.mxu0 %v132
    %138 = vmatprep.subr.mxu0 0.0
    %139 = vmatpush1.msra.mxu0 0.0
    %140 = vmatprep.subr.mxu0 0.0
    %141 = vmatpush1.msra.mxu0 0.0
    %142 = vmatprep.subr.mxu0 0.0
    %143 = vmatpush1.msra.mxu0 0.0
    %144 = vmatprep.subr.mxu0 0.0
    %145 = vmatpush1.msra.mxu0 0.0
    %146 = vmatprep.subr.mxu0 0.0
    %147 = vmatpush1.msra.mxu0 0.0
    %148 = vmatprep.subr.mxu0 0.0
    %149 = vmatpush1.msra.mxu0 0.0
    %150 = vmatprep.subr.mxu0 0.0
    %151 = vmatpush1.msra.mxu0 0.0
    %152 = vmatprep.subr.mxu0 0.0
    %153 = vmatpush1.msra.mxu0 0.0
    %154 = vmatprep.subr.mxu0 0.0
    %155 = vmatpush1.msra.mxu0 0.0
    %156 = vmatprep.subr.mxu0 0.0
    %157 = vmatpush1.msra.mxu0 0.0
    %158 = vmatprep.subr.mxu0 0.0
    %159 = vmatpush1.msra.mxu0 0.0
    %160 = vmatprep.subr.mxu0 0.0
    %161 = vmatpush1.msra.mxu0 0.0
    %162 = vmatprep.subr.mxu0 0.0
    %163 = vmatpush1.msra.mxu0 0.0
    %164 = vmatprep.subr.mxu0 0.0
    %165 = vmatpush1.msra.mxu0 0.0
    %166 = vmatprep.subr.mxu0 0.0
    %167 = vmatpush1.msra.mxu0 0.0
    %168 = vmatprep.subr.mxu0 0.0
    %169 = vmatpush1.msra.mxu0 0.0
    %170 = vmatprep.subr.mxu0 0.0
    %171 = vmatpush1.msra.mxu0 0.0
    %172 = vmatprep.subr.mxu0 0.0
    %173 = vmatpush1.msra.mxu0 0.0
    %174 = vmatprep.subr.mxu0 0.0
    %175 = vmatpush1.msra.mxu0 0.0
    %176 = vmatprep.subr.mxu0 0.0
    %177 = vmatpush1.msra.mxu0 0.0
    %178 = vmatprep.subr.mxu0 0.0
    %179 = vmatpush1.msra.mxu0 0.0
    %180 = vmatprep.subr.mxu0 0.0
    %181 = vmatpush1.msra.mxu0 0.0
    %182 = vmatprep.subr.mxu0 0.0
    %183 = vmatpush1.msra.mxu0 0.0
    %184 = vmatprep.subr.mxu0 0.0
    %185 = vmatpush1.msra.mxu0 0.0
    %186 = vmatprep.subr.mxu0 0.0
    %187 = vmatpush1.msra.mxu0 0.0
    %188 = vmatprep.subr.mxu0 0.0
    %189 = vmatpush1.msra.mxu0 0.0
    %190 = vmatprep.subr.mxu0 0.0
    %191 = vmatpush1.msra.mxu0 0.0
    %192 = vmatprep.subr.mxu0 0.0
    %193 = vmatpush1.msra.mxu0 0.0
    %194 = vmatprep.subr.mxu0 0.0
    %195 = vmatpush1.msra.mxu0 0.0
    %196 = vmatprep.subr.mxu0 0.0
    %197 = vmatpush1.msra.mxu0 0.0
    %198 = vmatprep.mubr.f32.mxu0 0.0
    %199 = vmatmul.mubr.f32.gmra.mrb[0].mxu0 %v128
    %v200 = vpop.f32.mrb[0].mxu0
    %v201 = vadd.f32 %v121, %v200
    %v202 = vpop.f32.mrb[0].mxu0
    %203 = vdwg.mxu0
    %v204 = vtanh.pop %v201
    %v206 = vlaneseq
    %v207 = vshrl.u32 %v206, 7
    %v208 = vsub.s32 0, %v207
    %v209 = vrot.slane %v123, %v208
    %v210 = vlaneseq
    %v211 = vshrl.u32 %v210, 7
    %v212 = vsub.s32 1, %v211
    %v213 = vrot.slane %v123, %v212
    %216 = vmatprep.subr.mxu0 %v42
    %217 = vmatpush1.msra.mxu0 %v41
    %218 = vmatprep.subr.mxu0 %v44
    %219 = vmatpush1.msra.mxu0 %v43
    %220 = vmatprep.subr.mxu0 %v46
    %221 = vmatpush1.msra.mxu0 %v45
    %222 = vmatprep.subr.mxu0 %v48
    %223 = vmatpush1.msra.mxu0 %v47
    %224 = vmatprep.subr.mxu0 %v50
    %225 = vmatpush1.msra.mxu0 %v49
    %226 = vmatprep.subr.mxu0 %v52
    %227 = vmatpush1.msra.mxu0 %v51
    %228 = vmatprep.subr.mxu0 %v54
    %229 = vmatpush1.msra.mxu0 %v53
    %230 = vmatprep.subr.mxu0 %v56
    %231 = vmatpush1.msra.mxu0 %v55
    %232 = vmatprep.subr.mxu0 %v58
    %233 = vmatpush1.msra.mxu0 %v57
    %234 = vmatprep.subr.mxu0 %v60
    %235 = vmatpush1.msra.mxu0 %v59
    %236 = vmatprep.subr.mxu0 %v62
    %237 = vmatpush1.msra.mxu0 %v61
    %238 = vmatprep.subr.mxu0 %v64
    %239 = vmatpush1.msra.mxu0 %v63
    %240 = vmatprep.subr.mxu0 %v66
    %241 = vmatpush1.msra.mxu0 %v65
    %242 = vmatprep.subr.mxu0 %v68
    %243 = vmatpush1.msra.mxu0 %v67
    %244 = vmatprep.subr.mxu0 %v70
    %245 = vmatpush1.msra.mxu0 %v69
    %246 = vmatprep.subr.mxu0 %v72
    %247 = vmatpush1.msra.mxu0 %v71
    %248 = vmatprep.subr.mxu0 0.0
    %249 = vmatpush1.msra.mxu0 0.0
    %250 = vmatprep.subr.mxu0 0.0
    %251 = vmatpush1.msra.mxu0 0.0
    %252 = vmatprep.subr.mxu0 0.0
    %253 = vmatpush1.msra.mxu0 0.0
    %254 = vmatprep.subr.mxu0 0.0
    %255 = vmatpush1.msra.mxu0 0.0
    %256 = vmatprep.subr.mxu0 0.0
    %257 = vmatpush1.msra.mxu0 0.0
    %258 = vmatprep.subr.mxu0 0.0
    %259 = vmatpush1.msra.mxu0 0.0
    %260 = vmatprep.subr.mxu0 0.0
    %261 = vmatpush1.msra.mxu0 0.0
    %262 = vmatprep.subr.mxu0 0.0
    %263 = vmatpush1.msra.mxu0 0.0
    %264 = vmatprep.subr.mxu0 0.0
    %265 = vmatpush1.msra.mxu0 0.0
    %266 = vmatprep.subr.mxu0 0.0
    %267 = vmatpush1.msra.mxu0 0.0
    %268 = vmatprep.subr.mxu0 0.0
    %269 = vmatpush1.msra.mxu0 0.0
    %270 = vmatprep.subr.mxu0 0.0
    %271 = vmatpush1.msra.mxu0 0.0
    %272 = vmatprep.subr.mxu0 0.0
    %273 = vmatpush1.msra.mxu0 0.0
    %274 = vmatprep.subr.mxu0 0.0
    %275 = vmatpush1.msra.mxu0 0.0
    %276 = vmatprep.subr.mxu0 0.0
    %277 = vmatpush1.msra.mxu0 0.0
    %278 = vmatprep.subr.mxu0 0.0
    %279 = vmatpush1.msra.mxu0 0.0
    %280 = vmatprep.mubr.f32.mxu0 0.0
    %281 = vmatmul.mubr.f32.gmra.mrb[0].mxu0 %v204
    %v282 = vpop.f32.mrb[0].mxu0
    %v283 = vadd.f32 %v209, %v282
    %v284 = vpop.f32.mrb[0].mxu0
    %v285 = vadd.f32 %v213, %v284
    %286 = vdwg.mxu0
    %v287 = vtanh.pop %v283
    %v288 = vtanh.pop %v285
    %289 = vmatprep.subr.mxu0 0.0
    %290 = vmatpush1.msra.mxu0 %v73
    %291 = vmatprep.subr.mxu0 0.0
    %292 = vmatpush1.msra.mxu0 %v74
    %293 = vmatprep.subr.mxu0 0.0
    %294 = vmatpush1.msra.mxu0 %v75
    %295 = vmatprep.subr.mxu0 0.0
    %296 = vmatpush1.msra.mxu0 %v76
    %297 = vmatprep.subr.mxu0 0.0
    %298 = vmatpush1.msra.mxu0 %v77
    %299 = vmatprep.subr.mxu0 0.0
    %300 = vmatpush1.msra.mxu0 %v78
    %301 = vmatprep.subr.mxu0 0.0
    %302 = vmatpush1.msra.mxu0 %v79
    %303 = vmatprep.subr.mxu0 0.0
    %304 = vmatpush1.msra.mxu0 %v80
    %305 = vmatprep.subr.mxu0 0.0
    %306 = vmatpush1.msra.mxu0 %v81
    %307 = vmatprep.subr.mxu0 0.0
    %308 = vmatpush1.msra.mxu0 %v82
    %309 = vmatprep.subr.mxu0 0.0
    %310 = vmatpush1.msra.mxu0 %v83
    %311 = vmatprep.subr.mxu0 0.0
    %312 = vmatpush1.msra.mxu0 %v84
    %313 = vmatprep.subr.mxu0 0.0
    %314 = vmatpush1.msra.mxu0 %v85
    %315 = vmatprep.subr.mxu0 0.0
    %316 = vmatpush1.msra.mxu0 %v86
    %317 = vmatprep.subr.mxu0 0.0
    %318 = vmatpush1.msra.mxu0 %v87
    %319 = vmatprep.subr.mxu0 0.0
    %320 = vmatpush1.msra.mxu0 %v88
    %321 = vmatprep.subr.mxu0 0.0
    %322 = vmatpush1.msra.mxu0 %v89
    %323 = vmatprep.subr.mxu0 0.0
    %324 = vmatpush1.msra.mxu0 %v90
    %325 = vmatprep.subr.mxu0 0.0
    %326 = vmatpush1.msra.mxu0 %v91
    %327 = vmatprep.subr.mxu0 0.0
    %328 = vmatpush1.msra.mxu0 %v92
    %329 = vmatprep.subr.mxu0 0.0
    %330 = vmatpush1.msra.mxu0 %v93
    %331 = vmatprep.subr.mxu0 0.0
    %332 = vmatpush1.msra.mxu0 %v94
    %333 = vmatprep.subr.mxu0 0.0
    %334 = vmatpush1.msra.mxu0 %v95
    %335 = vmatprep.subr.mxu0 0.0
    %336 = vmatpush1.msra.mxu0 %v96
    %337 = vmatprep.subr.mxu0 0.0
    %338 = vmatpush1.msra.mxu0 %v97
    %339 = vmatprep.subr.mxu0 0.0
    %340 = vmatpush1.msra.mxu0 %v98
    %341 = vmatprep.subr.mxu0 0.0
    %342 = vmatpush1.msra.mxu0 %v99
    %343 = vmatprep.subr.mxu0 0.0
    %344 = vmatpush1.msra.mxu0 %v100
    %345 = vmatprep.subr.mxu0 0.0
    %346 = vmatpush1.msra.mxu0 %v101
    %347 = vmatprep.subr.mxu0 0.0
    %348 = vmatpush1.msra.mxu0 %v102
    %349 = vmatprep.subr.mxu0 0.0
    %350 = vmatpush1.msra.mxu0 %v103
    %351 = vmatprep.subr.mxu0 0.0
    %352 = vmatpush1.msra.mxu0 %v104
    %353 = vmatprep.mubr.f32.mxu0 %v288
    %354 = vmatmul.mubr.f32.gmra.mrb[0].mxu0 %v287
    %v355 = vpop.f32.mrb[0].mxu0
    %v356 = vadd.f32 %v124, %v355
    %v357 = vpop.f32.mrb[0].mxu0
    %358 = vdwg.mxu0
    %359 = vmatprep.subr.mxu0 0.0
    %360 = vmatpush1.msra.mxu0 %v105
    %361 = vmatprep.subr.mxu0 0.0
    %362 = vmatpush1.msra.mxu0 %v106
    %363 = vmatprep.subr.mxu0 0.0
    %364 = vmatpush1.msra.mxu0 %v107
    %365 = vmatprep.subr.mxu0 0.0
    %366 = vmatpush1.msra.mxu0 %v108
    %367 = vmatprep.subr.mxu0 0.0
    %368 = vmatpush1.msra.mxu0 %v109
    %369 = vmatprep.subr.mxu0 0.0
    %370 = vmatpush1.msra.mxu0 %v110
    %371 = vmatprep.subr.mxu0 0.0
    %372 = vmatpush1.msra.mxu0 %v111
    %373 = vmatprep.subr.mxu0 0.0
    %374 = vmatpush1.msra.mxu0 %v112
    %375 = vmatprep.subr.mxu0 0.0
    %376 = vmatpush1.msra.mxu0 %v113
    %377 = vmatprep.subr.mxu0 0.0
    %378 = vmatpush1.msra.mxu0 %v114
    %379 = vmatprep.subr.mxu0 0.0
    %380 = vmatpush1.msra.mxu0 %v115
    %381 = vmatprep.subr.mxu0 0.0
    %382 = vmatpush1.msra.mxu0 %v116
    %383 = vmatprep.subr.mxu0 0.0
    %384 = vmatpush1.msra.mxu0 %v117
    %385 = vmatprep.subr.mxu0 0.0
    %386 = vmatpush1.msra.mxu0 %v118
    %387 = vmatprep.subr.mxu0 0.0
    %388 = vmatpush1.msra.mxu0 %v119
    %389 = vmatprep.subr.mxu0 0.0
    %390 = vmatpush1.msra.mxu0 %v120
    %391 = vmatprep.subr.mxu0 0.0
    %392 = vmatpush1.msra.mxu0 0.0
    %393 = vmatprep.subr.mxu0 0.0
    %394 = vmatpush1.msra.mxu0 0.0
    %395 = vmatprep.subr.mxu0 0.0
    %396 = vmatpush1.msra.mxu0 0.0
    %397 = vmatprep.subr.mxu0 0.0
    %398 = vmatpush1.msra.mxu0 0.0
    %399 = vmatprep.subr.mxu0 0.0
    %400 = vmatpush1.msra.mxu0 0.0
    %401 = vmatprep.subr.mxu0 0.0
    %402 = vmatpush1.msra.mxu0 0.0
    %403 = vmatprep.subr.mxu0 0.0
    %404 = vmatpush1.msra.mxu0 0.0
    %405 = vmatprep.subr.mxu0 0.0
    %406 = vmatpush1.msra.mxu0 0.0
    %407 = vmatprep.subr.mxu0 0.0
    %408 = vmatpush1.msra.mxu0 0.0
    %409 = vmatprep.subr.mxu0 0.0
    %410 = vmatpush1.msra.mxu0 0.0
    %411 = vmatprep.subr.mxu0 0.0
    %412 = vmatpush1.msra.mxu0 0.0
    %413 = vmatprep.subr.mxu0 0.0
    %414 = vmatpush1.msra.mxu0 0.0
    %415 = vmatprep.subr.mxu0 0.0
    %416 = vmatpush1.msra.mxu0 0.0
    %417 = vmatprep.subr.mxu0 0.0
    %418 = vmatpush1.msra.mxu0 0.0
    %419 = vmatprep.subr.mxu0 0.0
    %420 = vmatpush1.msra.mxu0 0.0
    %421 = vmatprep.subr.mxu0 0.0
    %422 = vmatpush1.msra.mxu0 0.0
    %423 = vmatprep.mubr.f32.mxu0 0.0
    %424 = vmatmul.mubr.f32.gmra.mrb[0].mxu0 %v356
    %v425 = vpop.f32.mrb[0].mxu0
    %v426 = vadd.f32 %v125, %v425
    %v427 = vpop.f32.mrb[0].mxu0
    %428 = vdwg.mxu0
    %vm429 = vcmask 109568
    %430 = vst.msk [vmem:[#allocation7] sm:$0xf] %vm429, %v426
    // Predicated region
    $region18: #{tpu_custom_call.1} parent=1 // pred_check
      _
    $region19: #{tpu_custom_call.1} parent=1 // pred_check_branch
      %432 = sbr.rel (0) target = $region21
    $region20: #{tpu_custom_call.1} parent=1 // pred_region
      %s434 = ssub.s32 64, 64
      %435 = vsyncadd [#allocation4], %s434
      %s437 = sshll.u32 [#allocation7], 4
      %s438 = int_to_ptr.vmem [resolvable:$true] %s437
      %440 = dma.vmem_to_hbm [thread:$0]  %s438, 64, %s2, [#allocation4]
    $region21: #{tpu_custom_call.1} parent=1 // pred_fallthru
      _
    // Predicated region
    $region22: #{tpu_custom_call.1} parent=1 // pred_check
      _
    $region23: #{tpu_custom_call.1} parent=1 // pred_check_branch
      %442 = sbr.rel (0) target = $region25
    $region24: #{tpu_custom_call.1} parent=1 // pred_region
      %443 = dma.done [#allocation4], 64
    $region25: #{tpu_custom_call.1} parent=1 // pred_fallthru
      _
    %444 = vsyncpa [#allocation3], 1
    %445 = vsyncpa [#allocation6], 1
    %446 = vsyncpa [#allocation4], 1

</llo_original>
